<compile_context>
chip_gen: v7x
topology: tpu7x:2x2x1
jax: 0.10.0
libtpu: 0.0.40
codegen_flags: <defaults>
</compile_context>

<pallas_src>
import math

import jax
import jax.numpy as jnp
from jax import lax
from jax.experimental import pallas as pl
from jax.experimental.pallas import tpu as pltpu


# ---------------------------------------------------------------------------
# VMEM-aware sizing helpers
# ---------------------------------------------------------------------------

def _vmem_limit_bytes():
    """Scoped-VMEM limit to request, derived from the chip's physical VMEM."""
    try:
        cap = int(pltpu.get_tpu_info().vmem_capacity_bytes)  # 128 MiB v5e/v6e, 64 MiB v7x
    except Exception:
        cap = 64 * 1024 * 1024                               # conservative fallback
    # Leave headroom for compiler-internal scratch / semaphores.
    return max(32 * 1024 * 1024, min(cap * 3 // 4, 96 * 1024 * 1024))


def _divisor_tiles(n, candidates):
    return [t for t in candidates if t <= n and n % t == 0]


def _pick_prep_tile(B, D, budget):
    # Per-step live bytes (Pallas double-buffers every BlockSpec):
    #   x,y f32 inputs (4+4) + xn,yn bf16 outputs (2+2) + tiny f32 diag.
    for t in _divisor_tiles(B, (1024, 512, 256, 128, 64, 32, 16, 8)):
        if 2 * t * (12 * D + 4) <= budget:
            return t
    return B      # single full-extent block (small/demo or non-divisible B)


def _pick_loss_tiles(B, D, budget):
    # tn: keep a multiple of 256 when B allows (v6e/v7x MXU is 2x256x256);
    #     only fall back to 128 when 256 does not divide B.
    tn_cands = (512, 256) if B % 256 == 0 else (512, 256, 128)
    tn_opts = _divisor_tiles(B, tn_cands) or [B]
    # tm: grow as far as VMEM allows -- yn HBM re-reads scale with B/tm.
    tm_opts = _divisor_tiles(B, (2048, 1024, 512, 256, 128)) or [B]
    for tm in tm_opts:                 # prefer the largest row tile ...
        for tn in tn_opts:             # ... then the widest (256-aligned) col tile
            live = (2 * 2 * D * (tm + tn)      # bf16 xn/yn blocks, double-buffered
                    + 2 * 4 * (3 * tm + tn)    # diag blocks + f32 accumulators
                    + 8 * 4 * tm * tn)         # f32/i32 tile intermediates (conservative)
            if live <= budget:
                return tm, tn
    return B, B


# ---------------------------------------------------------------------------
# Kernels
# ---------------------------------------------------------------------------

def _prep_kernel(x_ref, y_ref, xn_ref, yn_ref, diag_ref):
    x = x_ref[...].astype(jnp.float32)
    y = y_ref[...].astype(jnp.float32)
    # x / sqrt(sum(x*x)) via rsqrt (EUP slot). +1e-12 guards 0/0 rows (the
    # PyTorch reference has no guard and would produce NaNs there).
    xn = x * lax.rsqrt(jnp.sum(x * x, axis=1, keepdims=True) + 1e-12)
    yn = y * lax.rsqrt(jnp.sum(y * y, axis=1, keepdims=True) + 1e-12)
    xn_lo = xn.astype(xn_ref.dtype)
    yn_lo = yn.astype(yn_ref.dtype)
    xn_ref[...] = xn_lo
    yn_ref[...] = yn_lo
    # diag[i] = sim[i,i], computed from the SAME low-precision values the MXU
    # sees in pass 2 (f32 accumulation) -> consistent with the sim tiles.
    diag_ref[...] = jnp.sum(
        xn_lo.astype(jnp.float32) * yn_lo.astype(jnp.float32),
        axis=1, keepdims=True)


def _loss_kernel(delta_ref, diag_r_ref, diag_c_ref, xn_ref, yn_ref,
                 rowloss_ref, rank_ref):
    i = pl.program_id(0)
    j = pl.program_id(1)
    delta = delta_ref[0]

    # sim tile = xn_i @ yn_j^T : low-precision inputs, f32 MXU accumulation.
    sim = lax.dot_general(
        xn_ref[...], yn_ref[...],
        dimension_numbers=(((1,), (1,)), ((), ())),
        preferred_element_type=jnp.float32)                 # (TM, TN) f32

    tm, tn = sim.shape
    diag_r = diag_r_ref[...]                                # (TM, 1): sim[r, r]
    diag_c = diag_c_ref[...]                                # (1, TN): sim[c, c]

    # Global off-diagonal mask -> exact "loss[i][i] = 0" semantics in-kernel
    # (no wrapper-side correction, no f32-vs-bf16 diagonal bias).
    row_ids = i * tm + lax.broadcasted_iota(jnp.int32, (tm, tn), 0)
    col_ids = j * tn + lax.broadcasted_iota(jnp.int32, (tm, tn), 1)
    off_diag = row_ids != col_ids

    term1 = jnp.maximum(0.0, sim - diag_r + delta)
    # sum_{r!=c} max(0, sim[c,r]-sim[r,r]+d) == sum_{r!=c} max(0, sim[r,c]-sim[c,c]+d)
    # (relabel the double sum) -> no (B,B) transpose needed.
    term2 = jnp.maximum(0.0, sim - diag_c + delta)
    contrib = jnp.where(off_diag, term1 + term2, 0.0)

    # rank[r] = #{c != r : sim[r,c] > sim[r,r]} == position of the "correct"
    # column in the descending sort of score[r,:] (ties aside).  This is all
    # the no-grad metrics need, so the (B,B) score matrix is never stored.
    gt = jnp.where(jnp.logical_and(off_diag, sim > diag_r), 1.0, 0.0)

    @pl.when(j == 0)
    def _():
        rowloss_ref[...] = jnp.zeros_like(rowloss_ref)
        rank_ref[...] = jnp.zeros_like(rank_ref)
    rowloss_ref[...] += jnp.sum(contrib, axis=1, keepdims=True)
    rank_ref[...] += jnp.sum(gt, axis=1, keepdims=True)


# ---------------------------------------------------------------------------
# Wrapper
# ---------------------------------------------------------------------------

def myloss_forward(x, y, delta, mxu_dtype=jnp.bfloat16):
    B, D = x.shape
    assert y.shape == (B, D)

    vmem_limit = _vmem_limit_bytes()
    budget = int(vmem_limit * 0.8)

    # ----- pass 1: row L2-normalization + diagonal --------------------------
    tp = _pick_prep_tile(B, D, budget)
    xn, yn, diag = pl.pallas_call(
        _prep_kernel,
        out_shape=(
            jax.ShapeDtypeStruct((B, D), mxu_dtype),
            jax.ShapeDtypeStruct((B, D), mxu_dtype),
            jax.ShapeDtypeStruct((B, 1), jnp.float32),
        ),
        grid=(B // tp,),
        in_specs=[
            pl.BlockSpec((tp, D), lambda i: (i, 0)),
            pl.BlockSpec((tp, D), lambda i: (i, 0)),
        ],
        out_specs=(
            pl.BlockSpec((tp, D), lambda i: (i, 0)),
            pl.BlockSpec((tp, D), lambda i: (i, 0)),
            pl.BlockSpec((tp, 1), lambda i: (i, 0)),
        ),
        compiler_params=pltpu.CompilerParams(
            dimension_semantics=("parallel",),
            vmem_limit_bytes=vmem_limit),
    )(x, y)

    diag_col = diag.reshape(1, B)      # tiny one-off layout change (B floats)

    # ----- pass 2: tiled similarity / hinge loss / rank counts --------------
    tm, tn = _pick_loss_tiles(B, D, budget)
    delta_arr = jnp.asarray([delta], dtype=jnp.float32)

    itemsize = jnp.dtype(mxu_dtype).itemsize
    cost = pl.CostEstimate(
        flops=2 * B * B * D,
        transcendentals=0,
        bytes_accessed=int(B * D * itemsize                 # xn streamed once
                           + (B // tm) * B * D * itemsize   # yn re-streamed per row block
                           + 16 * B))                       # diag in + (loss, rank) out

    row_loss, rank_cnt = pl.pallas_call(
        _loss_kernel,
        out_shape=(
            jax.ShapeDtypeStruct((B, 1), jnp.float32),
            jax.ShapeDtypeStruct((B, 1), jnp.float32),
        ),
        grid=(B // tm, B // tn),
        in_specs=[
            pl.BlockSpec(memory_space=pltpu.MemorySpace.SMEM),   # delta scalar
            pl.BlockSpec((tm, 1), lambda i, j: (i, 0)),          # diag rows
            pl.BlockSpec((1, tn), lambda i, j: (0, j)),          # diag cols
            pl.BlockSpec((tm, D), lambda i, j: (i, 0)),          # xn block
            # TODO(synk): pipeline_mode=pl.Buffered(3) on yn for skinny-D
            # shapes once the VMEM budget accounts for the extra buffer.
            pl.BlockSpec((tn, D), lambda i, j: (j, 0)),          # yn block
        ],
        out_specs=(
            pl.BlockSpec((tm, 1), lambda i, j: (i, 0)),          # row-loss acc
            pl.BlockSpec((tm, 1), lambda i, j: (i, 0)),          # rank-count acc
        ),
        compiler_params=pltpu.CompilerParams(
            dimension_semantics=("parallel", "arbitrary"),
            vmem_limit_bytes=vmem_limit),
        cost_estimate=cost,
    )(delta_arr, diag, diag_col, xn, yn)

    loss = jnp.sum(row_loss) / B

    # ----- no-grad metrics from the fused rank counts ------------------------
    # rank[i] == top-k position of the "correct" column i in row i of score
    # (score.topk in the PyTorch code); derived without materializing (B,B).
    # Exact ties are broken by value only (torch.topk order on ties may differ).
    rank = rank_cnt[:, 0]
    recall = [jnp.sum((rank < k).astype(jnp.int32)) for k in (1, 5, 10)]
    ndcg = jnp.sum(jnp.where(rank < 10.0,
                             jnp.float32(math.log(2.0)) / jnp.log(rank + 2.0),
                             jnp.float32(0.0)))

    return loss, recall, ndcg


if __name__ == "__main__":
    key = jax.random.PRNGKey(0)
    kx, ky = jax.random.split(key)
    B, D = 16, 32                      # small demo shapes; B >= 10 (topk(10))
    x = jax.random.normal(kx, (B, D), dtype=jnp.float32)
    y = jax.random.normal(ky, (B, D), dtype=jnp.float32)

    loss, recall, ndcg = myloss_forward(x, y, delta=0.2)
    jax.block_until_ready(loss)
    for r in recall:
        jax.block_until_ready(r)
    jax.block_until_ready(ndcg)
    print("KERNEL_OK")
</pallas_src>

<mosaic_0001>
module attributes {stable_mosaic.version = 11 : i64} {
  func.func @_prep_kernel(%arg0: i32, %arg1: memref<16x32xf32, #tpu.memory_space<vmem>>, %arg2: memref<16x32xf32, #tpu.memory_space<vmem>>, %arg3: memref<16x32xbf16, #tpu.memory_space<vmem>>, %arg4: memref<16x32xbf16, #tpu.memory_space<vmem>>, %arg5: memref<16x1xf32, #tpu.memory_space<vmem>>) attributes {dimension_semantics = [#tpu.dimension_semantics<parallel>], iteration_bounds = array<i64: 1>, scalar_prefetch = 0 : i64, scratch_operands = 0 : i64, tpu.core_type = #tpu.core_type<tc>, window_params = [{transform_indices = @transform_0, window_bounds = array<i64: 16, 32>}, {transform_indices = @transform_1, window_bounds = array<i64: 16, 32>}, {transform_indices = @transform_2, window_bounds = array<i64: 16, 32>}, {transform_indices = @transform_3, window_bounds = array<i64: 16, 32>}, {transform_indices = @transform_4, window_bounds = array<i64: 16, 1>}]} {
    %c0 = arith.constant 0 : index
    %c0_0 = arith.constant 0 : index
    %0 = vector.load %arg1[%c0, %c0_0] : memref<16x32xf32, #tpu.memory_space<vmem>>, vector<16x32xf32>
    %c0_1 = arith.constant 0 : index
    %c0_2 = arith.constant 0 : index
    %1 = vector.load %arg2[%c0_1, %c0_2] : memref<16x32xf32, #tpu.memory_space<vmem>>, vector<16x32xf32>
    %2 = arith.mulf %0, %0 : vector<16x32xf32>
    %cst = arith.constant dense<0.000000e+00> : vector<16xf32>
    %3 = vector.multi_reduction <add>, %2, %cst [1] : vector<16x32xf32> to vector<16xf32>
    %4 = vector.shape_cast %3 : vector<16xf32> to vector<16x1xf32>
    %cst_3 = arith.constant 9.99999996E-13 : f32
    %5 = vector.broadcast %cst_3 : f32 to vector<16x1xf32>
    %6 = arith.addf %4, %5 : vector<16x1xf32>
    %7 = math.rsqrt %6 : vector<16x1xf32>
    %8 = vector.broadcast %7 : vector<16x1xf32> to vector<16x32xf32>
    %9 = arith.mulf %0, %8 : vector<16x32xf32>
    %10 = arith.mulf %1, %1 : vector<16x32xf32>
    %cst_4 = arith.constant dense<0.000000e+00> : vector<16xf32>
    %11 = vector.multi_reduction <add>, %10, %cst_4 [1] : vector<16x32xf32> to vector<16xf32>
    %12 = vector.shape_cast %11 : vector<16xf32> to vector<16x1xf32>
    %cst_5 = arith.constant 9.99999996E-13 : f32
    %13 = vector.broadcast %cst_5 : f32 to vector<16x1xf32>
    %14 = arith.addf %12, %13 : vector<16x1xf32>
    %15 = math.rsqrt %14 : vector<16x1xf32>
    %16 = vector.broadcast %15 : vector<16x1xf32> to vector<16x32xf32>
    %17 = arith.mulf %1, %16 : vector<16x32xf32>
    %18 = arith.truncf %9 : vector<16x32xf32> to vector<16x32xbf16>
    %19 = arith.truncf %17 : vector<16x32xf32> to vector<16x32xbf16>
    %c0_6 = arith.constant 0 : index
    %c0_7 = arith.constant 0 : index
    %20 = vector.load %arg3[%c0_6, %c0_7] : memref<16x32xbf16, #tpu.memory_space<vmem>>, vector<16x32xbf16>
    tpu.vector_store %arg3[%c0_6, %c0_7], %18 {strides = array<i32>} : memref<16x32xbf16, #tpu.memory_space<vmem>>, vector<16x32xbf16>,
    %c0_8 = arith.constant 0 : index
    %c0_9 = arith.constant 0 : index
    %21 = vector.load %arg4[%c0_8, %c0_9] : memref<16x32xbf16, #tpu.memory_space<vmem>>, vector<16x32xbf16>
    tpu.vector_store %arg4[%c0_8, %c0_9], %19 {strides = array<i32>} : memref<16x32xbf16, #tpu.memory_space<vmem>>, vector<16x32xbf16>,
    %22 = arith.extf %18 : vector<16x32xbf16> to vector<16x32xf32>
    %23 = arith.extf %19 : vector<16x32xbf16> to vector<16x32xf32>
    %24 = arith.mulf %22, %23 : vector<16x32xf32>
    %cst_10 = arith.constant dense<0.000000e+00> : vector<16xf32>
    %25 = vector.multi_reduction <add>, %24, %cst_10 [1] : vector<16x32xf32> to vector<16xf32>
    %26 = vector.shape_cast %25 : vector<16xf32> to vector<16x1xf32>
    %c0_11 = arith.constant 0 : index
    %c0_12 = arith.constant 0 : index
    %27 = vector.load %arg5[%c0_11, %c0_12] : memref<16x1xf32, #tpu.memory_space<vmem>>, vector<16x1xf32>
    tpu.vector_store %arg5[%c0_11, %c0_12], %26 {strides = array<i32>} : memref<16x1xf32, #tpu.memory_space<vmem>>, vector<16x1xf32>,
    return
  }
  func.func @transform_0(%arg0: i32) -> (i32, i32) {
    %c0_i32 = arith.constant 0 : i32
    %c0_i32_0 = arith.constant 0 : i32
    return %arg0, %c0_i32 : i32, i32
  }
  func.func @transform_1(%arg0: i32) -> (i32, i32) {
    %c0_i32 = arith.constant 0 : i32
    %c0_i32_0 = arith.constant 0 : i32
    return %arg0, %c0_i32 : i32, i32
  }
  func.func @transform_2(%arg0: i32) -> (i32, i32) {
    %c0_i32 = arith.constant 0 : i32
    %c0_i32_0 = arith.constant 0 : i32
    return %arg0, %c0_i32 : i32, i32
  }
  func.func @transform_3(%arg0: i32) -> (i32, i32) {
    %c0_i32 = arith.constant 0 : i32
    %c0_i32_0 = arith.constant 0 : i32
    return %arg0, %c0_i32 : i32, i32
  }
  func.func @transform_4(%arg0: i32) -> (i32, i32) {
    %c0_i32 = arith.constant 0 : i32
    %c0_i32_0 = arith.constant 0 : i32
    return %arg0, %c0_i32 : i32, i32
  }
}

</mosaic_0001>

<llo_original>
// kernel: tpu_custom_call.1
$region0: #{tpu_custom_call.1}
  #allocation0 [shape = 'u32[]', space=smem, size = 0x4, offset = 0x4, fixed_abs, tag = 'smem constant byte address 0x4 - core index']
  #allocation1 [shape = 'u32[144,128]{1,0:T(1,128)}', space=vmem, size = 0x12000, scoped, tag = 'internal scratch']
  %s0 = inlined_call_operand.hbm [shape: f32[16,32], index: 0, kind: input, shape index: {}]
  %s1 = inlined_call_operand.hbm [shape: f32[16,32], index: 1, kind: input, shape index: {}]
  %s2 = inlined_call_operand.hbm [shape: bf16[16,32], index: 2, kind: output, shape index: {0}]
  %s3 = inlined_call_operand.hbm [shape: bf16[16,32], index: 3, kind: output, shape index: {1}]
  %s4 = inlined_call_operand.vmem [shape: f32[16,1], index: 4, kind: output, shape index: {2}]
  %5 = xla_tuple %s2, %s3, %s4
  %s6 = sld [smem:[#allocation0]]
  $region42: #{tpu_custom_call.1} parent=0
    _
  %s8 = ssub.s32 1, %s6
  %s9 = scalar_select 0, %s8, %s6
  $region1: #{tpu_custom_call.1} parent=0
    #allocation2 [shape = 'u8[8192]{0}', space=vmem, size = 0x2000, scoped, tag = 'input window, operand 0, single buffered']
    #allocation3 [shape = 's32[1]{0}', space=sflag, size = 0x4, scoped, tag = 'scoped memory for tpu_custom_call.1']
    #allocation4 [shape = 's32[1]{0}', space=sflag, size = 0x4, scoped, tag = 'scoped memory for tpu_custom_call.1']
    #allocation5 [shape = 'u8[8192]{0}', space=vmem, size = 0x2000, scoped, tag = 'input window, operand 1, single buffered']
    #allocation6 [shape = 's32[1]{0}', space=sflag, size = 0x4, scoped, tag = 'scoped memory for tpu_custom_call.1']
    #allocation7 [shape = 'u8[4096]{0}', space=vmem, size = 0x1000, scoped, tag = 'output window, operand 0, single buffered']
    #allocation8 [shape = 'u8[4096]{0}', space=vmem, size = 0x1000, scoped, tag = 'output window, operand 1, single buffered']
    #allocation9 [shape = 's32[1]{0}', space=sflag, size = 0x4, scoped, tag = 'scoped memory for tpu_custom_call.1']
    %10 = vsyncpa [#allocation3], 0
    %11 = vsyncpa [#allocation6], 0
    %12 = vsyncpa [#allocation4], 0
    %13 = vsyncpa [#allocation9], 0
    // Predicated region
    $region2: #{tpu_custom_call.1} parent=1 // pred_check
      _
    $region3: #{tpu_custom_call.1} parent=1 // pred_check_branch
      %15 = sbr.rel (0) target = $region5
    $region4: #{tpu_custom_call.1} parent=1 // pred_region
      %s17 = ssub.s32 256, 256
      %18 = vsyncadd [#allocation3], %s17
      %s19 = sshll.u32 [#allocation2], 4
      %s20 = int_to_ptr.vmem [resolvable:$true] %s19
      %25 = dma.hbm_to_vmem [thread:$0]  %s0, 256, %s20, [#allocation3], 128, 128, 8
    $region5: #{tpu_custom_call.1} parent=1 // pred_fallthru
      _
    // Predicated region
    $region6: #{tpu_custom_call.1} parent=1 // pred_check
      _
    $region7: #{tpu_custom_call.1} parent=1 // pred_check_branch
      %27 = sbr.rel (0) target = $region9
    $region8: #{tpu_custom_call.1} parent=1 // pred_region
      %s29 = ssub.s32 256, 256
      %30 = vsyncadd [#allocation6], %s29
      %s31 = sshll.u32 [#allocation5], 4
      %s32 = int_to_ptr.vmem [resolvable:$true] %s31
      %37 = dma.hbm_to_vmem [thread:$0]  %s1, 256, %s32, [#allocation6], 128, 128, 8
    $region9: #{tpu_custom_call.1} parent=1 // pred_fallthru
      _
    // Predicated region
    $region10: #{tpu_custom_call.1} parent=1 // pred_check
      _
    $region11: #{tpu_custom_call.1} parent=1 // pred_check_branch
      %39 = sbr.rel (0) target = $region13
    $region12: #{tpu_custom_call.1} parent=1 // pred_region
      %40 = dma.done [#allocation3], 256
    $region13: #{tpu_custom_call.1} parent=1 // pred_fallthru
      _
    // Predicated region
    $region14: #{tpu_custom_call.1} parent=1 // pred_check
      _
    $region15: #{tpu_custom_call.1} parent=1 // pred_check_branch
      %42 = sbr.rel (0) target = $region17
    $region16: #{tpu_custom_call.1} parent=1 // pred_region
      %43 = dma.done [#allocation6], 256
    $region17: #{tpu_custom_call.1} parent=1 // pred_fallthru
      _
    %v44 = vld [vmem:[#allocation2] sm:$0xff]
    %v45 = vld [vmem:[#allocation2 + $0x8] sm:$0xff]
    %v46 = vld [vmem:[#allocation5] sm:$0xff]
    %v47 = vld [vmem:[#allocation5 + $0x8] sm:$0xff]
    %v48 = vmul.f32 %v44, %v44
    %v49 = vmul.f32 %v45, %v45
    %vm50 = vcmask 261120
    %v51 = vsel %vm50, %v48, 0.0
    %52 = vadd.xlane.f32.xlu0 %v51
    %v53 = vpop.xlane.xlu0 %52
    %v54 = vsel %vm50, %v49, 0.0
    %55 = vadd.xlane.f32.xlu0 %v54
    %v56 = vpop.xlane.xlu0 %55
    %v57 = vadd.f32 %v53, 1e-12
    %v58 = vadd.f32 %v56, 1e-12
    %v59 = vrsqrt.pop %v57
    %v60 = vrsqrt.pop %v58
    %v61 = vmul.f32 %v44, %v59
    %v62 = vmul.f32 %v45, %v60
    %v63 = vmul.f32 %v46, %v46
    %v64 = vmul.f32 %v47, %v47
    %v65 = vsel %vm50, %v63, 0.0
    %66 = vadd.xlane.f32.xlu0 %v65
    %v67 = vpop.xlane.xlu0 %66
    %v68 = vsel %vm50, %v64, 0.0
    %69 = vadd.xlane.f32.xlu0 %v68
    %v70 = vpop.xlane.xlu0 %69
    %v71 = vadd.f32 %v67, 1e-12
    %v72 = vadd.f32 %v70, 1e-12
    %v73 = vrsqrt.pop %v71
    %v74 = vrsqrt.pop %v72
    %v75 = vmul.f32 %v46, %v73
    %v76 = vmul.f32 %v47, %v74
    %v77 = vpack.c.bf16 %v62, %v61
    %v78 = vpack.c.bf16 %v76, %v75
    %v80 = vunpack.c.l.b16 %v77
    %v81 = vunpack.c.h.b16 %v77
    %v82 = vpack.c.b16 %v80, %v80
    %v83 = vpack.c.b16 %v81, %v81
    %vm86 = vcmask 257024
    %87 = vst.msk [vmem:[#allocation7] sm:$0xf] %vm86, %v82
    %88 = vst.msk [vmem:[#allocation7 + $0x4] sm:$0xf] %vm86, %v83
    %v90 = vunpack.c.l.b16 %v78
    %v91 = vunpack.c.h.b16 %v78
    %v92 = vpack.c.b16 %v90, %v90
    %v93 = vpack.c.b16 %v91, %v91
    %96 = vst.msk [vmem:[#allocation8] sm:$0xf] %vm86, %v92
    %97 = vst.msk [vmem:[#allocation8 + $0x4] sm:$0xf] %vm86, %v93
    %v98 = vunpack.c.l.bf16 %v77
    %v99 = vunpack.c.h.bf16 %v77
    %v100 = vunpack.c.l.bf16 %v78
    %v101 = vunpack.c.h.bf16 %v78
    %v102 = vmul.f32 %v98, %v100
    %v103 = vmul.f32 %v99, %v101
    %v104 = vsel %vm50, %v102, 0.0
    %105 = vadd.xlane.f32.xlu0 %v104
    %v106 = vpop.xlane.xlu0 %105
    %v107 = vsel %vm50, %v103, 0.0
    %108 = vadd.xlane.f32.xlu0 %v107
    %v109 = vpop.xlane.xlu0 %108
    %vm110 = vcmask 7168
    %111 = vst.msk [vmem:[%s4] sm:$0xff] %vm110, %v106
    %112 = vst.msk [vmem:[%s4 + $0x8] sm:$0xff] %vm110, %v109
    // Predicated region
    $region18: #{tpu_custom_call.1} parent=1 // pred_check
      _
    $region19: #{tpu_custom_call.1} parent=1 // pred_check_branch
      %114 = sbr.rel (0) target = $region21
    $region20: #{tpu_custom_call.1} parent=1 // pred_region
      %s116 = ssub.s32 128, 128
      %117 = vsyncadd [#allocation4], %s116
      %s118 = sshll.u32 [#allocation7], 4
      %s119 = int_to_ptr.vmem [resolvable:$true] %s118
      %124 = dma.vmem_to_hbm [thread:$0]  %s119, 128, %s2, [#allocation4], 64, 64, 4
    $region21: #{tpu_custom_call.1} parent=1 // pred_fallthru
      _
    // Predicated region
    $region22: #{tpu_custom_call.1} parent=1 // pred_check
      _
    $region23: #{tpu_custom_call.1} parent=1 // pred_check_branch
      %126 = sbr.rel (0) target = $region25
    $region24: #{tpu_custom_call.1} parent=1 // pred_region
      %s128 = ssub.s32 128, 128
      %129 = vsyncadd [#allocation9], %s128
      %s130 = sshll.u32 [#allocation8], 4
      %s131 = int_to_ptr.vmem [resolvable:$true] %s130
      %136 = dma.vmem_to_hbm [thread:$0]  %s131, 128, %s3, [#allocation9], 64, 64, 4
    $region25: #{tpu_custom_call.1} parent=1 // pred_fallthru
      _
    // Predicated region
    $region26: #{tpu_custom_call.1} parent=1 // pred_check
      _
    $region27: #{tpu_custom_call.1} parent=1 // pred_check_branch
      %138 = sbr.rel (0) target = $region29
    $region28: #{tpu_custom_call.1} parent=1 // pred_region
      _
    $region29: #{tpu_custom_call.1} parent=1 // pred_fallthru
      _
    // Predicated region
    $region30: #{tpu_custom_call.1} parent=1 // pred_check
      _
    $region31: #{tpu_custom_call.1} parent=1 // pred_check_branch
      %140 = sbr.rel (0) target = $region33
    $region32: #{tpu_custom_call.1} parent=1 // pred_region
      %141 = dma.done [#allocation4], 128
    $region33: #{tpu_custom_call.1} parent=1 // pred_fallthru
      _
    // Predicated region
    $region34: #{tpu_custom_call.1} parent=1 // pred_check
      _
    $region35: #{tpu_custom_call.1} parent=1 // pred_check_branch
      %143 = sbr.rel (0) target = $region37
    $region36: #{tpu_custom_call.1} parent=1 // pred_region
      %144 = dma.done [#allocation9], 128
    $region37: #{tpu_custom_call.1} parent=1 // pred_fallthru
      _
    // Predicated region
    $region38: #{tpu_custom_call.1} parent=1 // pred_check
      _
    $region39: #{tpu_custom_call.1} parent=1 // pred_check_branch
      %146 = sbr.rel (0) target = $region41
    $region40: #{tpu_custom_call.1} parent=1 // pred_region
      _
    $region41: #{tpu_custom_call.1} parent=1 // pred_fallthru
      _
    %147 = vsyncpa [#allocation3], 1
    %148 = vsyncpa [#allocation6], 1
    %149 = vsyncpa [#allocation4], 1
    %150 = vsyncpa [#allocation9], 1

</llo_original>
